<compile_context>
chip_gen: v6e
topology: v6e:2x2x1
jax: 0.10.0
libtpu: 0.0.40
codegen_flags: <defaults>
</compile_context>

<pallas_src>
import jax
import jax.numpy as jnp
from jax.experimental import pallas as pl
from jax.experimental.pallas import tpu as pltpu

STATE_DIM = 55
ACTION_DIM = 21
HIDDEN_DIM = 128
HIDDEN_LAYERS = 2                      # hidden->hidden Linear layers
IN_DIM = STATE_DIM + ACTION_DIM        # 76
IN_DIM_PADDED = 128                    # layer-1 contraction dim padded in-kernel


def _round_up(x, m):
    return (x + m - 1) // m * m


def _choose_tb(batch, tb):
    """Pick the batch tile: multiple of 8 (sublane), single full-extent tile for
    tiny batches, and >= 2 balanced tiles for larger batches (v7x megacore)."""
    if batch <= 8:
        return batch                               # block == full array extent
    tb = max(8, min(tb, _round_up(batch, 8)))
    if batch > 64 and pl.cdiv(batch, tb) < 2:      # single tile -> split for v7x
        tb = max(8, _round_up(pl.cdiv(batch, 2), 8))
    return tb


def _mlp_kernel(x_ref,
                w1_ref, b1_ref,
                w2_ref, b2_ref,
                w3_ref, b3_ref,
                w4_ref, b4_ref,
                out_ref,
                xp_ref):
    """Fused MLP forward for one batch tile: 4 MXU matmuls, f32 throughout."""
    # Zero-pad the input tile 76 -> 128 in VMEM scratch (w1 rows 76..127 are zero,
    # so the pad columns contribute nothing; we still zero them to avoid any
    # stale NaN/Inf in uninitialized VMEM).
    xp_ref[...] = jnp.zeros_like(xp_ref)
    xp_ref[:, :IN_DIM] = x_ref[...].astype(xp_ref.dtype)
    x = xp_ref[...]                                          # f32 [tb, 128]

    # Layer 1: (state+action) -> hidden, ReLU
    h = jnp.dot(x, w1_ref[...], preferred_element_type=jnp.float32)
    h = jnp.maximum(h + b1_ref[...], 0.0)

    # Hidden layer 1
    h = jnp.dot(h, w2_ref[...], preferred_element_type=jnp.float32)
    h = jnp.maximum(h + b2_ref[...], 0.0)

    # Hidden layer 2
    h = jnp.dot(h, w3_ref[...], preferred_element_type=jnp.float32)
    h = jnp.maximum(h + b3_ref[...], 0.0)

    # Output layer: hidden -> state (no activation)
    y = jnp.dot(h, w4_ref[...], preferred_element_type=jnp.float32)
    out_ref[...] = (y + b4_ref[...]).astype(out_ref.dtype)


def mlp_state_predictor(x, params, *, tb=1024):
    """Run the fused MLP Pallas kernel.

    Args:
      x: [batch, IN_DIM] float32.
      params: dict with f32 weights w1..w4 ([in, out]; w1 zero-padded to
        [128, 128] on the contraction dim) and f32 biases b1..b4 ([1, out]).
      tb: requested batch tile size (rows per grid step).
    Returns:
      [batch, STATE_DIM] float32.
    """
    batch = x.shape[0]
    tb = _choose_tb(batch, tb)
    num_tiles = pl.cdiv(batch, tb)

    w1, b1 = params["w1"], params["b1"]
    w2, b2 = params["w2"], params["b2"]
    w3, b3 = params["w3"], params["b3"]
    w4, b4 = params["w4"], params["b4"]

    def batch_map(i):
        return (i, 0)

    def const_map(i):
        return (0, 0)

    in_specs = [
        pl.BlockSpec((tb, IN_DIM), batch_map),      # x tile, pipelined
        pl.BlockSpec(w1.shape, const_map),          # weights/biases resident
        pl.BlockSpec(b1.shape, const_map),
        pl.BlockSpec(w2.shape, const_map),
        pl.BlockSpec(b2.shape, const_map),
        pl.BlockSpec(w3.shape, const_map),
        pl.BlockSpec(b3.shape, const_map),
        pl.BlockSpec(w4.shape, const_map),
        pl.BlockSpec(b4.shape, const_map),
    ]
    out_specs = pl.BlockSpec((tb, STATE_DIM), batch_map)

    # Advisory cost estimate (helps XLA schedule neighbors around this call).
    matmul_flops = (IN_DIM_PADDED * HIDDEN_DIM
                    + HIDDEN_LAYERS * HIDDEN_DIM * HIDDEN_DIM
                    + HIDDEN_DIM * STATE_DIM)
    weight_bytes = 4 * (IN_DIM_PADDED * HIDDEN_DIM
                        + HIDDEN_LAYERS * HIDDEN_DIM * HIDDEN_DIM
                        + HIDDEN_DIM * STATE_DIM
                        + (HIDDEN_LAYERS + 1) * HIDDEN_DIM + STATE_DIM)
    cost = pl.CostEstimate(
        flops=2 * batch * matmul_flops,
        transcendentals=0,
        bytes_accessed=batch * 4 * (IN_DIM + STATE_DIM) + weight_bytes)

    # v5e's default scoped VMEM is only 16 MiB; raise it only for very large tiles.
    vmem_limit = 64 * 1024 * 1024 if tb >= 2048 else None

    out = pl.pallas_call(
        _mlp_kernel,
        out_shape=jax.ShapeDtypeStruct((batch, STATE_DIM), jnp.float32),
        grid=(num_tiles,),
        in_specs=in_specs,
        out_specs=out_specs,
        scratch_shapes=[pltpu.VMEM((tb, IN_DIM_PADDED), jnp.float32)],
        compiler_params=pltpu.CompilerParams(
            dimension_semantics=("parallel",),       # megacore split on v7x
            vmem_limit_bytes=vmem_limit),
        cost_estimate=cost,
    )(x, w1, b1, w2, b2, w3, b3, w4, b4)

    return out


def init_params(key):
    """Deterministic init matching nn.Linear defaults (bound = 1/sqrt(fan_in)).

    Weights stored as [in, out] in f32 (w1 zero-padded to [128, 128] on the
    contraction dim); biases stored as [1, out] in f32.
    """
    dims = [(IN_DIM, HIDDEN_DIM)]
    for _ in range(HIDDEN_LAYERS):
        dims.append((HIDDEN_DIM, HIDDEN_DIM))
    dims.append((HIDDEN_DIM, STATE_DIM))

    params = {}
    for i, (fan_in, fan_out) in enumerate(dims, start=1):
        key, kw, kb = jax.random.split(key, 3)
        bound = 1.0 / jnp.sqrt(fan_in)
        w = jax.random.uniform(kw, (fan_in, fan_out), jnp.float32, -bound, bound)
        b = jax.random.uniform(kb, (1, fan_out), jnp.float32, -bound, bound)
        if i == 1:
            # zero-pad the contraction dim 76 -> 128 (zero rows contribute nothing)
            w = jnp.pad(w, ((0, IN_DIM_PADDED - fan_in), (0, 0)))
        params[f"w{i}"] = w
        params[f"b{i}"] = b
    return params


def _reference(x, params):
    """Plain-JAX f32 reference matching the PyTorch module's forward pass."""
    h = jnp.maximum(jnp.dot(x, params["w1"][:IN_DIM]) + params["b1"], 0.0)
    h = jnp.maximum(jnp.dot(h, params["w2"]) + params["b2"], 0.0)
    h = jnp.maximum(jnp.dot(h, params["w3"]) + params["b3"], 0.0)
    return jnp.dot(h, params["w4"]) + params["b4"]


if __name__ == "__main__":
    key = jax.random.PRNGKey(0)
    key, kx1, kx2 = jax.random.split(key, 3)
    params = init_params(key)

    # Small, module-implied shape: batch=8 rows of (state 55 + action 21) = 76.
    x_small = jax.random.normal(kx1, (8, IN_DIM), jnp.float32)
    out_small = jax.block_until_ready(mlp_state_predictor(x_small, params))
    ref_small = _reference(x_small, params)
    assert out_small.shape == (8, STATE_DIM)
    assert jnp.allclose(out_small, ref_small, atol=2e-2, rtol=2e-2), \
        "mismatch vs reference (small batch)"

    # Exercise the tiled / pipelined path: ragged batch split into 2 balanced tiles.
    x_big = jax.random.normal(kx2, (300, IN_DIM), jnp.float32)
    out_big = jax.block_until_ready(mlp_state_predictor(x_big, params))
    ref_big = _reference(x_big, params)
    assert out_big.shape == (300, STATE_DIM)
    assert jnp.allclose(out_big, ref_big, atol=2e-2, rtol=2e-2), \
        "mismatch vs reference (tiled / ragged batch)"

    print("KERNEL_OK")
</pallas_src>

<mosaic_0001>
module attributes {stable_mosaic.version = 11 : i64} {
  func.func @_mlp_kernel(%arg0: i32, %arg1: memref<8x76xf32, #tpu.memory_space<vmem>>, %arg2: memref<128x128xf32, #tpu.memory_space<vmem>>, %arg3: memref<1x128xf32, #tpu.memory_space<vmem>>, %arg4: memref<128x128xf32, #tpu.memory_space<vmem>>, %arg5: memref<1x128xf32, #tpu.memory_space<vmem>>, %arg6: memref<128x128xf32, #tpu.memory_space<vmem>>, %arg7: memref<1x128xf32, #tpu.memory_space<vmem>>, %arg8: memref<128x55xf32, #tpu.memory_space<vmem>>, %arg9: memref<1x55xf32, #tpu.memory_space<vmem>>, %arg10: memref<8x55xf32, #tpu.memory_space<vmem>>, %arg11: memref<8x128xf32, #tpu.memory_space<vmem>>) attributes {dimension_semantics = [#tpu.dimension_semantics<parallel>], iteration_bounds = array<i64: 1>, scalar_prefetch = 0 : i64, scratch_operands = 1 : i64, tpu.core_type = #tpu.core_type<tc>, window_params = [{transform_indices = @transform_0, window_bounds = array<i64: 8, 76>}, {pipeline_mode = #tpu.pipeline_mode<synchronous>, transform_indices = @transform_1, window_bounds = array<i64: 128, 128>}, {pipeline_mode = #tpu.pipeline_mode<synchronous>, transform_indices = @transform_2, window_bounds = array<i64: 1, 128>}, {pipeline_mode = #tpu.pipeline_mode<synchronous>, transform_indices = @transform_3, window_bounds = array<i64: 128, 128>}, {pipeline_mode = #tpu.pipeline_mode<synchronous>, transform_indices = @transform_4, window_bounds = array<i64: 1, 128>}, {pipeline_mode = #tpu.pipeline_mode<synchronous>, transform_indices = @transform_5, window_bounds = array<i64: 128, 128>}, {pipeline_mode = #tpu.pipeline_mode<synchronous>, transform_indices = @transform_6, window_bounds = array<i64: 1, 128>}, {pipeline_mode = #tpu.pipeline_mode<synchronous>, transform_indices = @transform_7, window_bounds = array<i64: 128, 55>}, {pipeline_mode = #tpu.pipeline_mode<synchronous>, transform_indices = @transform_8, window_bounds = array<i64: 1, 55>}, {transform_indices = @transform_9, window_bounds = array<i64: 8, 55>}]} {
    %cst = arith.constant 0.000000e+00 : f32
    %0 = vector.broadcast %cst : f32 to vector<8x128xf32>
    %c0 = arith.constant 0 : index
    %c0_0 = arith.constant 0 : index
    %1 = vector.load %arg11[%c0, %c0_0] : memref<8x128xf32, #tpu.memory_space<vmem>>, vector<8x128xf32>
    tpu.vector_store %arg11[%c0, %c0_0], %0 {strides = array<i32>} : memref<8x128xf32, #tpu.memory_space<vmem>>, vector<8x128xf32>,
    %c0_1 = arith.constant 0 : index
    %c0_2 = arith.constant 0 : index
    %2 = vector.load %arg1[%c0_1, %c0_2] : memref<8x76xf32, #tpu.memory_space<vmem>>, vector<8x76xf32>
    %c0_3 = arith.constant 0 : index
    %c0_4 = arith.constant 0 : index
    %3 = vector.load %arg11[%c0_3, %c0_4] : memref<8x128xf32, #tpu.memory_space<vmem>>, vector<8x76xf32>
    tpu.vector_store %arg11[%c0_3, %c0_4], %2 {strides = array<i32>} : memref<8x128xf32, #tpu.memory_space<vmem>>, vector<8x76xf32>,
    %c0_5 = arith.constant 0 : index
    %c0_6 = arith.constant 0 : index
    %4 = vector.load %arg11[%c0_5, %c0_6] : memref<8x128xf32, #tpu.memory_space<vmem>>, vector<8x128xf32>
    %c0_7 = arith.constant 0 : index
    %c0_8 = arith.constant 0 : index
    %5 = vector.load %arg2[%c0_7, %c0_8] : memref<128x128xf32, #tpu.memory_space<vmem>>, vector<128x128xf32>
    %cst_9 = arith.constant dense<0.000000e+00> : vector<8x128xf32>
    %6 = tpu.matmul %4, %5, %cst_9 {dimension_numbers = #tpu.dot_dimension_numbers<[1], [0], [0], [1], [0, 0, 1, 1], [], []>} : vector<8x128xf32>, vector<128x128xf32>, vector<8x128xf32> -> vector<8x128xf32>
    %c0_10 = arith.constant 0 : index
    %c0_11 = arith.constant 0 : index
    %7 = vector.load %arg3[%c0_10, %c0_11] : memref<1x128xf32, #tpu.memory_space<vmem>>, vector<1x128xf32>
    %8 = vector.broadcast %7 : vector<1x128xf32> to vector<8x128xf32>
    %9 = arith.addf %6, %8 : vector<8x128xf32>
    %cst_12 = arith.constant 0.000000e+00 : f32
    %10 = vector.broadcast %cst_12 : f32 to vector<8x128xf32>
    %11 = arith.maximumf %9, %10 : vector<8x128xf32>
    %c0_13 = arith.constant 0 : index
    %c0_14 = arith.constant 0 : index
    %12 = vector.load %arg4[%c0_13, %c0_14] : memref<128x128xf32, #tpu.memory_space<vmem>>, vector<128x128xf32>
    %cst_15 = arith.constant dense<0.000000e+00> : vector<8x128xf32>
    %13 = tpu.matmul %11, %12, %cst_15 {dimension_numbers = #tpu.dot_dimension_numbers<[1], [0], [0], [1], [0, 0, 1, 1], [], []>} : vector<8x128xf32>, vector<128x128xf32>, vector<8x128xf32> -> vector<8x128xf32>
    %c0_16 = arith.constant 0 : index
    %c0_17 = arith.constant 0 : index
    %14 = vector.load %arg5[%c0_16, %c0_17] : memref<1x128xf32, #tpu.memory_space<vmem>>, vector<1x128xf32>
    %15 = vector.broadcast %14 : vector<1x128xf32> to vector<8x128xf32>
    %16 = arith.addf %13, %15 : vector<8x128xf32>
    %cst_18 = arith.constant 0.000000e+00 : f32
    %17 = vector.broadcast %cst_18 : f32 to vector<8x128xf32>
    %18 = arith.maximumf %16, %17 : vector<8x128xf32>
    %c0_19 = arith.constant 0 : index
    %c0_20 = arith.constant 0 : index
    %19 = vector.load %arg6[%c0_19, %c0_20] : memref<128x128xf32, #tpu.memory_space<vmem>>, vector<128x128xf32>
    %cst_21 = arith.constant dense<0.000000e+00> : vector<8x128xf32>
    %20 = tpu.matmul %18, %19, %cst_21 {dimension_numbers = #tpu.dot_dimension_numbers<[1], [0], [0], [1], [0, 0, 1, 1], [], []>} : vector<8x128xf32>, vector<128x128xf32>, vector<8x128xf32> -> vector<8x128xf32>
    %c0_22 = arith.constant 0 : index
    %c0_23 = arith.constant 0 : index
    %21 = vector.load %arg7[%c0_22, %c0_23] : memref<1x128xf32, #tpu.memory_space<vmem>>, vector<1x128xf32>
    %22 = vector.broadcast %21 : vector<1x128xf32> to vector<8x128xf32>
    %23 = arith.addf %20, %22 : vector<8x128xf32>
    %cst_24 = arith.constant 0.000000e+00 : f32
    %24 = vector.broadcast %cst_24 : f32 to vector<8x128xf32>
    %25 = arith.maximumf %23, %24 : vector<8x128xf32>
    %c0_25 = arith.constant 0 : index
    %c0_26 = arith.constant 0 : index
    %26 = vector.load %arg8[%c0_25, %c0_26] : memref<128x55xf32, #tpu.memory_space<vmem>>, vector<128x55xf32>
    %cst_27 = arith.constant dense<0.000000e+00> : vector<8x55xf32>
    %27 = tpu.matmul %25, %26, %cst_27 {dimension_numbers = #tpu.dot_dimension_numbers<[1], [0], [0], [1], [0, 0, 1, 1], [], []>} : vector<8x128xf32>, vector<128x55xf32>, vector<8x55xf32> -> vector<8x55xf32>
    %c0_28 = arith.constant 0 : index
    %c0_29 = arith.constant 0 : index
    %28 = vector.load %arg9[%c0_28, %c0_29] : memref<1x55xf32, #tpu.memory_space<vmem>>, vector<1x55xf32>
    %29 = vector.broadcast %28 : vector<1x55xf32> to vector<8x55xf32>
    %30 = arith.addf %27, %29 : vector<8x55xf32>
    %c0_30 = arith.constant 0 : index
    %c0_31 = arith.constant 0 : index
    %31 = vector.load %arg10[%c0_30, %c0_31] : memref<8x55xf32, #tpu.memory_space<vmem>>, vector<8x55xf32>
    tpu.vector_store %arg10[%c0_30, %c0_31], %30 {strides = array<i32>} : memref<8x55xf32, #tpu.memory_space<vmem>>, vector<8x55xf32>,
    return
  }
  func.func @transform_0(%arg0: i32) -> (i32, i32) {
    %c0_i32 = arith.constant 0 : i32
    %c0_i32_0 = arith.constant 0 : i32
    return %arg0, %c0_i32 : i32, i32
  }
  func.func @transform_1(%arg0: i32) -> (i32, i32) {
    %c0_i32 = arith.constant 0 : i32
    %c0_i32_0 = arith.constant 0 : i32
    %c0_i32_1 = arith.constant 0 : i32
    return %c0_i32, %c0_i32_0 : i32, i32
  }
  func.func @transform_2(%arg0: i32) -> (i32, i32) {
    %c0_i32 = arith.constant 0 : i32
    %c0_i32_0 = arith.constant 0 : i32
    %c0_i32_1 = arith.constant 0 : i32
    return %c0_i32, %c0_i32_0 : i32, i32
  }
  func.func @transform_3(%arg0: i32) -> (i32, i32) {
    %c0_i32 = arith.constant 0 : i32
    %c0_i32_0 = arith.constant 0 : i32
    %c0_i32_1 = arith.constant 0 : i32
    return %c0_i32, %c0_i32_0 : i32, i32
  }
  func.func @transform_4(%arg0: i32) -> (i32, i32) {
    %c0_i32 = arith.constant 0 : i32
    %c0_i32_0 = arith.constant 0 : i32
    %c0_i32_1 = arith.constant 0 : i32
    return %c0_i32, %c0_i32_0 : i32, i32
  }
  func.func @transform_5(%arg0: i32) -> (i32, i32) {
    %c0_i32 = arith.constant 0 : i32
    %c0_i32_0 = arith.constant 0 : i32
    %c0_i32_1 = arith.constant 0 : i32
    return %c0_i32, %c0_i32_0 : i32, i32
  }
  func.func @transform_6(%arg0: i32) -> (i32, i32) {
    %c0_i32 = arith.constant 0 : i32
    %c0_i32_0 = arith.constant 0 : i32
    %c0_i32_1 = arith.constant 0 : i32
    return %c0_i32, %c0_i32_0 : i32, i32
  }
  func.func @transform_7(%arg0: i32) -> (i32, i32) {
    %c0_i32 = arith.constant 0 : i32
    %c0_i32_0 = arith.constant 0 : i32
    %c0_i32_1 = arith.constant 0 : i32
    return %c0_i32, %c0_i32_0 : i32, i32
  }
  func.func @transform_8(%arg0: i32) -> (i32, i32) {
    %c0_i32 = arith.constant 0 : i32
    %c0_i32_0 = arith.constant 0 : i32
    %c0_i32_1 = arith.constant 0 : i32
    return %c0_i32, %c0_i32_0 : i32, i32
  }
  func.func @transform_9(%arg0: i32) -> (i32, i32) {
    %c0_i32 = arith.constant 0 : i32
    %c0_i32_0 = arith.constant 0 : i32
    return %arg0, %c0_i32 : i32, i32
  }
}

</mosaic_0001>

<llo_original>
// kernel: tpu_custom_call.1
$region0: #{tpu_custom_call.1}
  #allocation0 [shape = 'u32[]', space=smem, size = 0x4, offset = 0x4, fixed_abs, tag = 'smem constant byte address 0x4 - core index']
  #allocation1 [shape = 'u32[144,128]{1,0:T(1,128)}', space=vmem, size = 0x12000, scoped, tag = 'internal scratch']
  #allocation2 [shape = 'f32[8,128]{1,0:T(8,128)}', space=vmem, size = 0x1000, scoped, tag = 'scratch operand']
  %s0 = inlined_call_operand.vmem [shape: f32[8,76], index: 0, kind: input, shape index: {}]
  %s1 = inlined_call_operand.vmem [shape: f32[128,128], index: 1, kind: input, shape index: {}]
  %s2 = inlined_call_operand.vmem [shape: f32[1,128], index: 2, kind: input, shape index: {}]
  %s3 = inlined_call_operand.hbm [shape: f32[128,128], index: 3, kind: input, shape index: {}]
  %s4 = inlined_call_operand.vmem [shape: f32[1,128], index: 4, kind: input, shape index: {}]
  %s5 = inlined_call_operand.hbm [shape: f32[128,128], index: 5, kind: input, shape index: {}]
  %s6 = inlined_call_operand.vmem [shape: f32[1,128], index: 6, kind: input, shape index: {}]
  %s7 = inlined_call_operand.vmem [shape: f32[128,55], index: 7, kind: input, shape index: {}]
  %s8 = inlined_call_operand.vmem [shape: f32[1,55], index: 8, kind: input, shape index: {}]
  %s9 = inlined_call_operand.hbm [shape: f32[8,55], index: 9, kind: output, shape index: {}]
  %s10 = sld [smem:[#allocation0]]
  $region54: #{tpu_custom_call.1} parent=0
    _
  %s12 = ssub.s32 1, %s10
  %s13 = scalar_select 0, %s12, %s10
  $region1: #{tpu_custom_call.1} parent=0
    #allocation3 [shape = 'u8[65536]{0}', space=vmem, size = 0x10000, scoped, tag = 'input window, operand 3, single buffered']
    #allocation4 [shape = 's32[1]{0}', space=sflag, size = 0x4, scoped, tag = 'scoped memory for tpu_custom_call.1']
    #allocation5 [shape = 's32[1]{0}', space=sflag, size = 0x4, scoped, tag = 'scoped memory for tpu_custom_call.1']
    #allocation6 [shape = 'u8[65536]{0}', space=vmem, size = 0x10000, scoped, tag = 'input window, operand 5, single buffered']
    #allocation7 [shape = 's32[1]{0}', space=sflag, size = 0x4, scoped, tag = 'scoped memory for tpu_custom_call.1']
    #allocation8 [shape = 'u8[4096]{0}', space=vmem, size = 0x1000, scoped, tag = 'output window, operand 0, single buffered']
    %14 = vsyncpa [#allocation4], 0
    %15 = vsyncpa [#allocation7], 0
    %16 = vsyncpa [#allocation5], 0
    // Predicated region
    $region2: #{tpu_custom_call.1} parent=1 // pred_check
      _
    $region3: #{tpu_custom_call.1} parent=1 // pred_check_branch
      %18 = sbr.rel (0) target = $region5
    $region4: #{tpu_custom_call.1} parent=1 // pred_region
      _
    $region5: #{tpu_custom_call.1} parent=1 // pred_fallthru
      _
    // Predicated region
    $region6: #{tpu_custom_call.1} parent=1 // pred_check
      _
    $region7: #{tpu_custom_call.1} parent=1 // pred_check_branch
      %20 = sbr.rel (0) target = $region9
    $region8: #{tpu_custom_call.1} parent=1 // pred_region
      _
    $region9: #{tpu_custom_call.1} parent=1 // pred_fallthru
      _
    // Predicated region
    $region10: #{tpu_custom_call.1} parent=1 // pred_check
      _
    $region11: #{tpu_custom_call.1} parent=1 // pred_check_branch
      %22 = sbr.rel (0) target = $region13
    $region12: #{tpu_custom_call.1} parent=1 // pred_region
      _
    $region13: #{tpu_custom_call.1} parent=1 // pred_fallthru
      _
    // Predicated region
    $region14: #{tpu_custom_call.1} parent=1 // pred_check
      _
    $region15: #{tpu_custom_call.1} parent=1 // pred_check_branch
      %24 = sbr.rel (0) target = $region17
    $region16: #{tpu_custom_call.1} parent=1 // pred_region
      %s26 = ssub.s32 2048, 2048
      %27 = vsyncadd [#allocation4], %s26
      %s28 = sshll.u32 [#allocation3], 4
      %s29 = int_to_ptr.vmem [resolvable:$true] %s28
      %34 = dma.hbm_to_vmem [thread:$0]  %s3, 2048, %s29, [#allocation4], 128, 128, 8
    $region17: #{tpu_custom_call.1} parent=1 // pred_fallthru
      _
    // Predicated region
    $region18: #{tpu_custom_call.1} parent=1 // pred_check
      _
    $region19: #{tpu_custom_call.1} parent=1 // pred_check_branch
      %36 = sbr.rel (0) target = $region21
    $region20: #{tpu_custom_call.1} parent=1 // pred_region
      _
    $region21: #{tpu_custom_call.1} parent=1 // pred_fallthru
      _
    // Predicated region
    $region22: #{tpu_custom_call.1} parent=1 // pred_check
      _
    $region23: #{tpu_custom_call.1} parent=1 // pred_check_branch
      %38 = sbr.rel (0) target = $region25
    $region24: #{tpu_custom_call.1} parent=1 // pred_region
      %s40 = ssub.s32 2048, 2048
      %41 = vsyncadd [#allocation7], %s40
      %s42 = sshll.u32 [#allocation6], 4
      %s43 = int_to_ptr.vmem [resolvable:$true] %s42
      %48 = dma.hbm_to_vmem [thread:$0]  %s5, 2048, %s43, [#allocation7], 128, 128, 8
    $region25: #{tpu_custom_call.1} parent=1 // pred_fallthru
      _
    // Predicated region
    $region26: #{tpu_custom_call.1} parent=1 // pred_check
      _
    $region27: #{tpu_custom_call.1} parent=1 // pred_check_branch
      %50 = sbr.rel (0) target = $region29
    $region28: #{tpu_custom_call.1} parent=1 // pred_region
      _
    $region29: #{tpu_custom_call.1} parent=1 // pred_fallthru
      _
    // Predicated region
    $region30: #{tpu_custom_call.1} parent=1 // pred_check
      _
    $region31: #{tpu_custom_call.1} parent=1 // pred_check_branch
      %52 = sbr.rel (0) target = $region33
    $region32: #{tpu_custom_call.1} parent=1 // pred_region
      _
    $region33: #{tpu_custom_call.1} parent=1 // pred_fallthru
      _
    // Predicated region
    $region34: #{tpu_custom_call.1} parent=1 // pred_check
      _
    $region35: #{tpu_custom_call.1} parent=1 // pred_check_branch
      %54 = sbr.rel (0) target = $region37
    $region36: #{tpu_custom_call.1} parent=1 // pred_region
      _
    $region37: #{tpu_custom_call.1} parent=1 // pred_fallthru
      _
    // Predicated region
    $region38: #{tpu_custom_call.1} parent=1 // pred_check
      _
    $region39: #{tpu_custom_call.1} parent=1 // pred_check_branch
      %56 = sbr.rel (0) target = $region41
    $region40: #{tpu_custom_call.1} parent=1 // pred_region
      %57 = dma.done [#allocation4], 2048
    $region41: #{tpu_custom_call.1} parent=1 // pred_fallthru
      _
    // Predicated region
    $region42: #{tpu_custom_call.1} parent=1 // pred_check
      _
    $region43: #{tpu_custom_call.1} parent=1 // pred_check_branch
      %59 = sbr.rel (0) target = $region45
    $region44: #{tpu_custom_call.1} parent=1 // pred_region
      %60 = dma.done [#allocation7], 2048
    $region45: #{tpu_custom_call.1} parent=1 // pred_fallthru
      _
    %61 = vst [vmem:[#allocation2] sm:$0xff] 0.0
    %v62 = vld [vmem:[%s0] sm:$0xff]
    %vm63 = vcmask 621568
    %64 = vst.msk [vmem:[#allocation2] sm:$0xff] %vm63, %v62
    %v65 = vld [vmem:[#allocation2] sm:$0xff]
    %v66 = vld [vmem:[%s1] sm:$0xff]
    %v67 = vld [vmem:[%s1 + $0x8] sm:$0xff]
    %v68 = vld [vmem:[%s1 + $0x10] sm:$0xff]
    %v69 = vld [vmem:[%s1 + $0x18] sm:$0xff]
    %v70 = vld [vmem:[%s1 + $0x20] sm:$0xff]
    %v71 = vld [vmem:[%s1 + $0x28] sm:$0xff]
    %v72 = vld [vmem:[%s1 + $0x30] sm:$0xff]
    %v73 = vld [vmem:[%s1 + $0x38] sm:$0xff]
    %v74 = vld [vmem:[%s1 + $0x40] sm:$0xff]
    %v75 = vld [vmem:[%s1 + $0x48] sm:$0xff]
    %v76 = vld [vmem:[%s1 + $0x50] sm:$0xff]
    %v77 = vld [vmem:[%s1 + $0x58] sm:$0xff]
    %v78 = vld [vmem:[%s1 + $0x60] sm:$0xff]
    %v79 = vld [vmem:[%s1 + $0x68] sm:$0xff]
    %v80 = vld [vmem:[%s1 + $0x70] sm:$0xff]
    %v81 = vld [vmem:[%s1 + $0x78] sm:$0xff]
    %v82 = vld [vmem:[%s2] sm:$0x1]
    %v84 = vlaneseq
    %v85 = vshrl.u32 %v84, 7
    %v86 = vsub.s32 0, %v85
    %v87 = vrot.slane %v82, %v86
    %89 = vmatprep.subr.mxu0 0.0
    %90 = vmatpush1.msra.mxu0 %v81
    %91 = vmatprep.subr.mxu0 0.0
    %92 = vmatpush1.msra.mxu0 %v80
    %93 = vmatprep.subr.mxu0 0.0
    %94 = vmatpush1.msra.mxu0 %v79
    %95 = vmatprep.subr.mxu0 0.0
    %96 = vmatpush1.msra.mxu0 %v78
    %97 = vmatprep.subr.mxu0 0.0
    %98 = vmatpush1.msra.mxu0 %v77
    %99 = vmatprep.subr.mxu0 0.0
    %100 = vmatpush1.msra.mxu0 %v76
    %101 = vmatprep.subr.mxu0 0.0
    %102 = vmatpush1.msra.mxu0 %v75
    %103 = vmatprep.subr.mxu0 0.0
    %104 = vmatpush1.msra.mxu0 %v74
    %105 = vmatprep.subr.mxu0 0.0
    %106 = vmatpush1.msra.mxu0 %v73
    %107 = vmatprep.subr.mxu0 0.0
    %108 = vmatpush1.msra.mxu0 %v72
    %109 = vmatprep.subr.mxu0 0.0
    %110 = vmatpush1.msra.mxu0 %v71
    %111 = vmatprep.subr.mxu0 0.0
    %112 = vmatpush1.msra.mxu0 %v70
    %113 = vmatprep.subr.mxu0 0.0
    %114 = vmatpush1.msra.mxu0 %v69
    %115 = vmatprep.subr.mxu0 0.0
    %116 = vmatpush1.msra.mxu0 %v68
    %117 = vmatprep.subr.mxu0 0.0
    %118 = vmatpush1.msra.mxu0 %v67
    %119 = vmatprep.subr.mxu0 0.0
    %120 = vmatpush1.msra.mxu0 %v66
    %121 = vmatprep.subr.mxu0 0.0
    %122 = vmatpush2.msra.mxu0 0.0
    %123 = vmatprep.subr.mxu0 0.0
    %124 = vmatpush2.msra.mxu0 0.0
    %125 = vmatprep.subr.mxu0 0.0
    %126 = vmatpush2.msra.mxu0 0.0
    %127 = vmatprep.subr.mxu0 0.0
    %128 = vmatpush2.msra.mxu0 0.0
    %129 = vmatprep.subr.mxu0 0.0
    %130 = vmatpush2.msra.mxu0 0.0
    %131 = vmatprep.subr.mxu0 0.0
    %132 = vmatpush2.msra.mxu0 0.0
    %133 = vmatprep.subr.mxu0 0.0
    %134 = vmatpush2.msra.mxu0 0.0
    %135 = vmatprep.subr.mxu0 0.0
    %136 = vmatpush2.msra.mxu0 0.0
    %137 = vmatprep.subr.mxu0 0.0
    %138 = vmatpush2.msra.mxu0 0.0
    %139 = vmatprep.subr.mxu0 0.0
    %140 = vmatpush2.msra.mxu0 0.0
    %141 = vmatprep.subr.mxu0 0.0
    %142 = vmatpush2.msra.mxu0 0.0
    %143 = vmatprep.subr.mxu0 0.0
    %144 = vmatpush2.msra.mxu0 0.0
    %145 = vmatprep.subr.mxu0 0.0
    %146 = vmatpush2.msra.mxu0 0.0
    %147 = vmatprep.subr.mxu0 0.0
    %148 = vmatpush2.msra.mxu0 0.0
    %149 = vmatprep.subr.mxu0 0.0
    %150 = vmatpush2.msra.mxu0 0.0
    %151 = vmatprep.subr.mxu0 0.0
    %152 = vmatpush2.msra.mxu0 0.0
    %153 = vmatprep.mubr.f32.mxu0 0.0
    %154 = vmatmul.mubr.f32.gmra.mxu0 %v65
    %v155 = vpop.f32.mrf.mxu0
    %v156 = vadd.f32 %v87, %v155
    %v157 = vpop.f32.mrf.mxu0
    %158 = vdwg.mxu0
    %v159 = vmax.f32 %v156, 0.0
    %v160 = vld [vmem:[#allocation3] sm:$0xff]
    %v161 = vld [vmem:[#allocation3 + $0x8] sm:$0xff]
    %v162 = vld [vmem:[#allocation3 + $0x10] sm:$0xff]
    %v163 = vld [vmem:[#allocation3 + $0x18] sm:$0xff]
    %v164 = vld [vmem:[#allocation3 + $0x20] sm:$0xff]
    %v165 = vld [vmem:[#allocation3 + $0x28] sm:$0xff]
    %v166 = vld [vmem:[#allocation3 + $0x30] sm:$0xff]
    %v167 = vld [vmem:[#allocation3 + $0x38] sm:$0xff]
    %v168 = vld [vmem:[#allocation3 + $0x40] sm:$0xff]
    %v169 = vld [vmem:[#allocation3 + $0x48] sm:$0xff]
    %v170 = vld [vmem:[#allocation3 + $0x50] sm:$0xff]
    %v171 = vld [vmem:[#allocation3 + $0x58] sm:$0xff]
    %v172 = vld [vmem:[#allocation3 + $0x60] sm:$0xff]
    %v173 = vld [vmem:[#allocation3 + $0x68] sm:$0xff]
    %v174 = vld [vmem:[#allocation3 + $0x70] sm:$0xff]
    %v175 = vld [vmem:[#allocation3 + $0x78] sm:$0xff]
    %v176 = vld [vmem:[%s4] sm:$0x1]
    %v178 = vlaneseq
    %v179 = vshrl.u32 %v178, 7
    %v180 = vsub.s32 0, %v179
    %v181 = vrot.slane %v176, %v180
    %183 = vmatprep.subr.mxu0 0.0
    %184 = vmatpush1.msra.mxu0 %v175
    %185 = vmatprep.subr.mxu0 0.0
    %186 = vmatpush1.msra.mxu0 %v174
    %187 = vmatprep.subr.mxu0 0.0
    %188 = vmatpush1.msra.mxu0 %v173
    %189 = vmatprep.subr.mxu0 0.0
    %190 = vmatpush1.msra.mxu0 %v172
    %191 = vmatprep.subr.mxu0 0.0
    %192 = vmatpush1.msra.mxu0 %v171
    %193 = vmatprep.subr.mxu0 0.0
    %194 = vmatpush1.msra.mxu0 %v170
    %195 = vmatprep.subr.mxu0 0.0
    %196 = vmatpush1.msra.mxu0 %v169
    %197 = vmatprep.subr.mxu0 0.0
    %198 = vmatpush1.msra.mxu0 %v168
    %199 = vmatprep.subr.mxu0 0.0
    %200 = vmatpush1.msra.mxu0 %v167
    %201 = vmatprep.subr.mxu0 0.0
    %202 = vmatpush1.msra.mxu0 %v166
    %203 = vmatprep.subr.mxu0 0.0
    %204 = vmatpush1.msra.mxu0 %v165
    %205 = vmatprep.subr.mxu0 0.0
    %206 = vmatpush1.msra.mxu0 %v164
    %207 = vmatprep.subr.mxu0 0.0
    %208 = vmatpush1.msra.mxu0 %v163
    %209 = vmatprep.subr.mxu0 0.0
    %210 = vmatpush1.msra.mxu0 %v162
    %211 = vmatprep.subr.mxu0 0.0
    %212 = vmatpush1.msra.mxu0 %v161
    %213 = vmatprep.subr.mxu0 0.0
    %214 = vmatpush1.msra.mxu0 %v160
    %215 = vmatprep.subr.mxu0 0.0
    %216 = vmatpush2.msra.mxu0 0.0
    %217 = vmatprep.subr.mxu0 0.0
    %218 = vmatpush2.msra.mxu0 0.0
    %219 = vmatprep.subr.mxu0 0.0
    %220 = vmatpush2.msra.mxu0 0.0
    %221 = vmatprep.subr.mxu0 0.0
    %222 = vmatpush2.msra.mxu0 0.0
    %223 = vmatprep.subr.mxu0 0.0
    %224 = vmatpush2.msra.mxu0 0.0
    %225 = vmatprep.subr.mxu0 0.0
    %226 = vmatpush2.msra.mxu0 0.0
    %227 = vmatprep.subr.mxu0 0.0
    %228 = vmatpush2.msra.mxu0 0.0
    %229 = vmatprep.subr.mxu0 0.0
    %230 = vmatpush2.msra.mxu0 0.0
    %231 = vmatprep.subr.mxu0 0.0
    %232 = vmatpush2.msra.mxu0 0.0
    %233 = vmatprep.subr.mxu0 0.0
    %234 = vmatpush2.msra.mxu0 0.0
    %235 = vmatprep.subr.mxu0 0.0
    %236 = vmatpush2.msra.mxu0 0.0
    %237 = vmatprep.subr.mxu0 0.0
    %238 = vmatpush2.msra.mxu0 0.0
    %239 = vmatprep.subr.mxu0 0.0
    %240 = vmatpush2.msra.mxu0 0.0
    %241 = vmatprep.subr.mxu0 0.0
    %242 = vmatpush2.msra.mxu0 0.0
    %243 = vmatprep.subr.mxu0 0.0
    %244 = vmatpush2.msra.mxu0 0.0
    %245 = vmatprep.subr.mxu0 0.0
    %246 = vmatpush2.msra.mxu0 0.0
    %247 = vmatprep.mubr.f32.mxu0 0.0
    %248 = vmatmul.mubr.f32.gmra.mxu0 %v159
    %v249 = vpop.f32.mrf.mxu0
    %v250 = vadd.f32 %v181, %v249
    %v251 = vpop.f32.mrf.mxu0
    %252 = vdwg.mxu0
    %v253 = vmax.f32 %v250, 0.0
    %v254 = vld [vmem:[#allocation6] sm:$0xff]
    %v255 = vld [vmem:[#allocation6 + $0x8] sm:$0xff]
    %v256 = vld [vmem:[#allocation6 + $0x10] sm:$0xff]
    %v257 = vld [vmem:[#allocation6 + $0x18] sm:$0xff]
    %v258 = vld [vmem:[#allocation6 + $0x20] sm:$0xff]
    %v259 = vld [vmem:[#allocation6 + $0x28] sm:$0xff]
    %v260 = vld [vmem:[#allocation6 + $0x30] sm:$0xff]
    %v261 = vld [vmem:[#allocation6 + $0x38] sm:$0xff]
    %v262 = vld [vmem:[#allocation6 + $0x40] sm:$0xff]
    %v263 = vld [vmem:[#allocation6 + $0x48] sm:$0xff]
    %v264 = vld [vmem:[#allocation6 + $0x50] sm:$0xff]
    %v265 = vld [vmem:[#allocation6 + $0x58] sm:$0xff]
    %v266 = vld [vmem:[#allocation6 + $0x60] sm:$0xff]
    %v267 = vld [vmem:[#allocation6 + $0x68] sm:$0xff]
    %v268 = vld [vmem:[#allocation6 + $0x70] sm:$0xff]
    %v269 = vld [vmem:[#allocation6 + $0x78] sm:$0xff]
    %v270 = vld [vmem:[%s6] sm:$0x1]
    %v272 = vlaneseq
    %v273 = vshrl.u32 %v272, 7
    %v274 = vsub.s32 0, %v273
    %v275 = vrot.slane %v270, %v274
    %277 = vmatprep.subr.mxu0 0.0
    %278 = vmatpush1.msra.mxu0 %v269
    %279 = vmatprep.subr.mxu0 0.0
    %280 = vmatpush1.msra.mxu0 %v268
    %281 = vmatprep.subr.mxu0 0.0
    %282 = vmatpush1.msra.mxu0 %v267
    %283 = vmatprep.subr.mxu0 0.0
    %284 = vmatpush1.msra.mxu0 %v266
    %285 = vmatprep.subr.mxu0 0.0
    %286 = vmatpush1.msra.mxu0 %v265
    %287 = vmatprep.subr.mxu0 0.0
    %288 = vmatpush1.msra.mxu0 %v264
    %289 = vmatprep.subr.mxu0 0.0
    %290 = vmatpush1.msra.mxu0 %v263
    %291 = vmatprep.subr.mxu0 0.0
    %292 = vmatpush1.msra.mxu0 %v262
    %293 = vmatprep.subr.mxu0 0.0
    %294 = vmatpush1.msra.mxu0 %v261
    %295 = vmatprep.subr.mxu0 0.0
    %296 = vmatpush1.msra.mxu0 %v260
    %297 = vmatprep.subr.mxu0 0.0
    %298 = vmatpush1.msra.mxu0 %v259
    %299 = vmatprep.subr.mxu0 0.0
    %300 = vmatpush1.msra.mxu0 %v258
    %301 = vmatprep.subr.mxu0 0.0
    %302 = vmatpush1.msra.mxu0 %v257
    %303 = vmatprep.subr.mxu0 0.0
    %304 = vmatpush1.msra.mxu0 %v256
    %305 = vmatprep.subr.mxu0 0.0
    %306 = vmatpush1.msra.mxu0 %v255
    %307 = vmatprep.subr.mxu0 0.0
    %308 = vmatpush1.msra.mxu0 %v254
    %309 = vmatprep.subr.mxu0 0.0
    %310 = vmatpush2.msra.mxu0 0.0
    %311 = vmatprep.subr.mxu0 0.0
    %312 = vmatpush2.msra.mxu0 0.0
    %313 = vmatprep.subr.mxu0 0.0
    %314 = vmatpush2.msra.mxu0 0.0
    %315 = vmatprep.subr.mxu0 0.0
    %316 = vmatpush2.msra.mxu0 0.0
    %317 = vmatprep.subr.mxu0 0.0
    %318 = vmatpush2.msra.mxu0 0.0
    %319 = vmatprep.subr.mxu0 0.0
    %320 = vmatpush2.msra.mxu0 0.0
    %321 = vmatprep.subr.mxu0 0.0
    %322 = vmatpush2.msra.mxu0 0.0
    %323 = vmatprep.subr.mxu0 0.0
    %324 = vmatpush2.msra.mxu0 0.0
    %325 = vmatprep.subr.mxu0 0.0
    %326 = vmatpush2.msra.mxu0 0.0
    %327 = vmatprep.subr.mxu0 0.0
    %328 = vmatpush2.msra.mxu0 0.0
    %329 = vmatprep.subr.mxu0 0.0
    %330 = vmatpush2.msra.mxu0 0.0
    %331 = vmatprep.subr.mxu0 0.0
    %332 = vmatpush2.msra.mxu0 0.0
    %333 = vmatprep.subr.mxu0 0.0
    %334 = vmatpush2.msra.mxu0 0.0
    %335 = vmatprep.subr.mxu0 0.0
    %336 = vmatpush2.msra.mxu0 0.0
    %337 = vmatprep.subr.mxu0 0.0
    %338 = vmatpush2.msra.mxu0 0.0
    %339 = vmatprep.subr.mxu0 0.0
    %340 = vmatpush2.msra.mxu0 0.0
    %341 = vmatprep.mubr.f32.mxu0 0.0
    %342 = vmatmul.mubr.f32.gmra.mxu0 %v253
    %v343 = vpop.f32.mrf.mxu0
    %v344 = vadd.f32 %v275, %v343
    %v345 = vpop.f32.mrf.mxu0
    %346 = vdwg.mxu0
    %v347 = vmax.f32 %v344, 0.0
    %v348 = vld [vmem:[%s7] sm:$0xff]
    %v349 = vld [vmem:[%s7 + $0x8] sm:$0xff]
    %v350 = vld [vmem:[%s7 + $0x10] sm:$0xff]
    %v351 = vld [vmem:[%s7 + $0x18] sm:$0xff]
    %v352 = vld [vmem:[%s7 + $0x20] sm:$0xff]
    %v353 = vld [vmem:[%s7 + $0x28] sm:$0xff]
    %v354 = vld [vmem:[%s7 + $0x30] sm:$0xff]
    %v355 = vld [vmem:[%s7 + $0x38] sm:$0xff]
    %v356 = vld [vmem:[%s7 + $0x40] sm:$0xff]
    %v357 = vld [vmem:[%s7 + $0x48] sm:$0xff]
    %v358 = vld [vmem:[%s7 + $0x50] sm:$0xff]
    %v359 = vld [vmem:[%s7 + $0x58] sm:$0xff]
    %v360 = vld [vmem:[%s7 + $0x60] sm:$0xff]
    %v361 = vld [vmem:[%s7 + $0x68] sm:$0xff]
    %v362 = vld [vmem:[%s7 + $0x70] sm:$0xff]
    %v363 = vld [vmem:[%s7 + $0x78] sm:$0xff]
    %v364 = vld [vmem:[%s8] sm:$0x1]
    %v366 = vlaneseq
    %v367 = vshrl.u32 %v366, 7
    %v368 = vsub.s32 0, %v367
    %v369 = vrot.slane %v364, %v368
    %371 = vmatprep.subr.mxu0 0.0
    %372 = vmatpush1.msra.mxu0 %v363
    %373 = vmatprep.subr.mxu0 0.0
    %374 = vmatpush1.msra.mxu0 %v362
    %375 = vmatprep.subr.mxu0 0.0
    %376 = vmatpush1.msra.mxu0 %v361
    %377 = vmatprep.subr.mxu0 0.0
    %378 = vmatpush1.msra.mxu0 %v360
    %379 = vmatprep.subr.mxu0 0.0
    %380 = vmatpush1.msra.mxu0 %v359
    %381 = vmatprep.subr.mxu0 0.0
    %382 = vmatpush1.msra.mxu0 %v358
    %383 = vmatprep.subr.mxu0 0.0
    %384 = vmatpush1.msra.mxu0 %v357
    %385 = vmatprep.subr.mxu0 0.0
    %386 = vmatpush1.msra.mxu0 %v356
    %387 = vmatprep.subr.mxu0 0.0
    %388 = vmatpush1.msra.mxu0 %v355
    %389 = vmatprep.subr.mxu0 0.0
    %390 = vmatpush1.msra.mxu0 %v354
    %391 = vmatprep.subr.mxu0 0.0
    %392 = vmatpush1.msra.mxu0 %v353
    %393 = vmatprep.subr.mxu0 0.0
    %394 = vmatpush1.msra.mxu0 %v352
    %395 = vmatprep.subr.mxu0 0.0
    %396 = vmatpush1.msra.mxu0 %v351
    %397 = vmatprep.subr.mxu0 0.0
    %398 = vmatpush1.msra.mxu0 %v350
    %399 = vmatprep.subr.mxu0 0.0
    %400 = vmatpush1.msra.mxu0 %v349
    %401 = vmatprep.subr.mxu0 0.0
    %402 = vmatpush1.msra.mxu0 %v348
    %403 = vmatprep.subr.mxu0 0.0
    %404 = vmatpush2.msra.mxu0 0.0
    %405 = vmatprep.subr.mxu0 0.0
    %406 = vmatpush2.msra.mxu0 0.0
    %407 = vmatprep.subr.mxu0 0.0
    %408 = vmatpush2.msra.mxu0 0.0
    %409 = vmatprep.subr.mxu0 0.0
    %410 = vmatpush2.msra.mxu0 0.0
    %411 = vmatprep.subr.mxu0 0.0
    %412 = vmatpush2.msra.mxu0 0.0
    %413 = vmatprep.subr.mxu0 0.0
    %414 = vmatpush2.msra.mxu0 0.0
    %415 = vmatprep.subr.mxu0 0.0
    %416 = vmatpush2.msra.mxu0 0.0
    %417 = vmatprep.subr.mxu0 0.0
    %418 = vmatpush2.msra.mxu0 0.0
    %419 = vmatprep.subr.mxu0 0.0
    %420 = vmatpush2.msra.mxu0 0.0
    %421 = vmatprep.subr.mxu0 0.0
    %422 = vmatpush2.msra.mxu0 0.0
    %423 = vmatprep.subr.mxu0 0.0
    %424 = vmatpush2.msra.mxu0 0.0
    %425 = vmatprep.subr.mxu0 0.0
    %426 = vmatpush2.msra.mxu0 0.0
    %427 = vmatprep.subr.mxu0 0.0
    %428 = vmatpush2.msra.mxu0 0.0
    %429 = vmatprep.subr.mxu0 0.0
    %430 = vmatpush2.msra.mxu0 0.0
    %431 = vmatprep.subr.mxu0 0.0
    %432 = vmatpush2.msra.mxu0 0.0
    %433 = vmatprep.subr.mxu0 0.0
    %434 = vmatpush2.msra.mxu0 0.0
    %435 = vmatprep.mubr.f32.mxu0 0.0
    %436 = vmatmul.mubr.f32.gmra.mxu0 %v347
    %v437 = vpop.f32.mrf.mxu0
    %v438 = vadd.f32 %v369, %v437
    %v439 = vpop.f32.mrf.mxu0
    %440 = vdwg.mxu0
    %vm441 = vcmask 449536
    %442 = vst.msk [vmem:[#allocation8] sm:$0xff] %vm441, %v438
    // Predicated region
    $region46: #{tpu_custom_call.1} parent=1 // pred_check
      _
    $region47: #{tpu_custom_call.1} parent=1 // pred_check_branch
      %444 = sbr.rel (0) target = $region49
    $region48: #{tpu_custom_call.1} parent=1 // pred_region
      %s446 = ssub.s32 128, 128
      %447 = vsyncadd [#allocation5], %s446
      %s449 = sshll.u32 [#allocation8], 4
      %s450 = int_to_ptr.vmem [resolvable:$true] %s449
      %452 = dma.vmem_to_hbm [thread:$0]  %s450, 128, %s9, [#allocation5]
    $region49: #{tpu_custom_call.1} parent=1 // pred_fallthru
      _
    // Predicated region
    $region50: #{tpu_custom_call.1} parent=1 // pred_check
      _
    $region51: #{tpu_custom_call.1} parent=1 // pred_check_branch
      %454 = sbr.rel (0) target = $region53
    $region52: #{tpu_custom_call.1} parent=1 // pred_region
      %455 = dma.done [#allocation5], 128
    $region53: #{tpu_custom_call.1} parent=1 // pred_fallthru
      _
    %456 = vsyncpa [#allocation4], 1
    %457 = vsyncpa [#allocation7], 1
    %458 = vsyncpa [#allocation5], 1

</llo_original>
